<compile_context>
chip_gen: v6e
topology: v6e:2x2x1
jax: 0.10.0
libtpu: 0.0.40
codegen_flags: <defaults>
</compile_context>

<pallas_src>
import functools

import jax
import jax.numpy as jnp
from jax.experimental import pallas as pl
from jax.experimental.pallas import tpu as pltpu


def _narnn_kernel(xT_ref, w1_ref, b1_ref, w2_ref, b2_ref, w3_ref, b3_ref,
                  oT_ref):
    # xT_ref: (input_dim, TB)   weights: (out_features, in_features)
    xT = xT_ref[...].astype(jnp.float32)

    # fc1 + tanh(sigmoid(.))
    h1 = jnp.dot(w1_ref[...], xT, preferred_element_type=jnp.float32)
    h1 = h1 + b1_ref[...]
    h1 = jnp.tanh(jax.nn.sigmoid(h1))

    # fc2 + logsigmoid(.)  (stable: min(x,0) - log1p(exp(-|x|)))
    h2 = jnp.dot(w2_ref[...], h1, preferred_element_type=jnp.float32)
    h2 = h2 + b2_ref[...]
    h2 = jnp.minimum(h2, 0.0) - jnp.log1p(jnp.exp(-jnp.abs(h2)))

    # fc3 (no activation)
    yT = jnp.dot(w3_ref[...], h2, preferred_element_type=jnp.float32)
    yT = yT + b3_ref[...]
    oT_ref[...] = yT.astype(oT_ref.dtype)


@functools.partial(jax.jit, static_argnames=("tb",))
def narnn_forward(x, w1, b1, w2, b2, w3, b3, *, tb=512):
    """x: (batch, input_dim). Weights in PyTorch layout (out, in), biases (out,)."""
    batch, input_dim = x.shape
    out_dim = w3.shape[0]

    # Batch tile: multiple of 128 (lane width), never larger than needed.
    tb = ((tb + 127) // 128) * 128
    tb = max(128, min(tb, ((batch + 127) // 128) * 128))
    padded = pl.cdiv(batch, tb) * tb

    # Lane-dense orientation: batch on the last axis.
    xT = jnp.pad(x, ((0, padded - batch), (0, 0))).T          # (input_dim, padded)
    b1c = b1.reshape(-1, 1).astype(jnp.float32)               # (10, 1)
    b2c = b2.reshape(-1, 1).astype(jnp.float32)
    b3c = b3.reshape(-1, 1).astype(jnp.float32)

    grid = (padded // tb,)
    const = lambda shape: pl.BlockSpec(shape, lambda i: (0, 0))  # VMEM-resident

    flops = 2 * batch * (input_dim * 10 + 10 * 10 + 10 * out_dim)
    bytes_accessed = 4 * (x.size + batch * out_dim
                          + w1.size + w2.size + w3.size
                          + b1.size + b2.size + b3.size)
    cost = pl.CostEstimate(flops=flops,
                           transcendentals=40 * batch,
                           bytes_accessed=bytes_accessed)

    yT = pl.pallas_call(
        _narnn_kernel,
        out_shape=jax.ShapeDtypeStruct((out_dim, padded), x.dtype),
        grid=grid,
        in_specs=[
            pl.BlockSpec((input_dim, tb), lambda i: (0, i)),   # x tile (lane = batch)
            const(w1.shape), const(b1c.shape),
            const(w2.shape), const(b2c.shape),
            const(w3.shape), const(b3c.shape),
        ],
        out_specs=pl.BlockSpec((out_dim, tb), lambda i: (0, i)),
        compiler_params=pltpu.CompilerParams(
            dimension_semantics=("parallel",),                 # megacore on v7x
            vmem_limit_bytes=32 * 1024 * 1024),                # headroom on all chips
        cost_estimate=cost,
    )(xT, w1, b1c, w2, b2c, w3, b3c)

    # Back to (batch, out_dim); drop batch padding.
    return yT.T[:batch]


def init_params(key, input_dim, output_dim):
    """Deterministic init mimicking nn.Linear (uniform +/- 1/sqrt(fan_in)).

    Weights are stored PyTorch-style: (out_features, in_features)."""
    def linear(key, fan_in, fan_out):
        kw, kb = jax.random.split(key)
        bound = 1.0 / jnp.sqrt(fan_in)
        w = jax.random.uniform(kw, (fan_out, fan_in), jnp.float32, -bound, bound)
        b = jax.random.uniform(kb, (fan_out,), jnp.float32, -bound, bound)
        return w, b

    k1, k2, k3 = jax.random.split(key, 3)
    w1, b1 = linear(k1, input_dim, 10)
    w2, b2 = linear(k2, 10, 10)
    w3, b3 = linear(k3, 10, output_dim)
    return w1, b1, w2, b2, w3, b3


def narnn_reference(x, w1, b1, w2, b2, w3, b3):
    h1 = jnp.tanh(jax.nn.sigmoid(x @ w1.T + b1))
    h2 = jax.nn.log_sigmoid(h1 @ w2.T + b2)
    return h2 @ w3.T + b3


if __name__ == "__main__":
    key = jax.random.PRNGKey(0)
    k_x, k_x2, k_p = jax.random.split(key, 3)

    batch, input_dim, output_dim = 8, 16, 4
    params = init_params(k_p, input_dim, output_dim)

    # Small shipped problem size (single 128-wide batch tile after padding).
    x = jax.random.normal(k_x, (batch, input_dim), jnp.float32)
    out = jax.block_until_ready(narnn_forward(x, *params))
    ref = narnn_reference(x, *params)
    assert out.shape == (batch, output_dim)
    assert jnp.allclose(out, ref, atol=1e-5, rtol=1e-5), (
        f"max abs err {jnp.max(jnp.abs(out - ref))}")

    # Larger batch exercising multiple grid steps (tiled + pipelined path).
    big_batch = 1000
    x2 = jax.random.normal(k_x2, (big_batch, input_dim), jnp.float32)
    out2 = jax.block_until_ready(narnn_forward(x2, *params, tb=512))
    ref2 = narnn_reference(x2, *params)
    assert out2.shape == (big_batch, output_dim)
    assert jnp.allclose(out2, ref2, atol=1e-5, rtol=1e-5), (
        f"max abs err {jnp.max(jnp.abs(out2 - ref2))}")

    print("KERNEL_OK")
</pallas_src>

<mosaic_0001>
module attributes {stable_mosaic.version = 11 : i64} {
  func.func @_narnn_kernel(%arg0: i32, %arg1: memref<16x128xf32, #tpu.memory_space<vmem>>, %arg2: memref<10x16xf32, #tpu.memory_space<vmem>>, %arg3: memref<10x1xf32, #tpu.memory_space<vmem>>, %arg4: memref<10x10xf32, #tpu.memory_space<vmem>>, %arg5: memref<10x1xf32, #tpu.memory_space<vmem>>, %arg6: memref<4x10xf32, #tpu.memory_space<vmem>>, %arg7: memref<4x1xf32, #tpu.memory_space<vmem>>, %arg8: memref<4x128xf32, #tpu.memory_space<vmem>>) attributes {dimension_semantics = [#tpu.dimension_semantics<parallel>], iteration_bounds = array<i64: 1>, scalar_prefetch = 0 : i64, scratch_operands = 0 : i64, tpu.core_type = #tpu.core_type<tc>, window_params = [{transform_indices = @transform_0, window_bounds = array<i64: 16, 128>}, {pipeline_mode = #tpu.pipeline_mode<synchronous>, transform_indices = @transform_1, window_bounds = array<i64: 10, 16>}, {pipeline_mode = #tpu.pipeline_mode<synchronous>, transform_indices = @transform_2, window_bounds = array<i64: 10, 1>}, {pipeline_mode = #tpu.pipeline_mode<synchronous>, transform_indices = @transform_3, window_bounds = array<i64: 10, 10>}, {pipeline_mode = #tpu.pipeline_mode<synchronous>, transform_indices = @transform_4, window_bounds = array<i64: 10, 1>}, {pipeline_mode = #tpu.pipeline_mode<synchronous>, transform_indices = @transform_5, window_bounds = array<i64: 4, 10>}, {pipeline_mode = #tpu.pipeline_mode<synchronous>, transform_indices = @transform_6, window_bounds = array<i64: 4, 1>}, {transform_indices = @transform_7, window_bounds = array<i64: 4, 128>}]} {
    %c0 = arith.constant 0 : index
    %c0_0 = arith.constant 0 : index
    %0 = vector.load %arg1[%c0, %c0_0] : memref<16x128xf32, #tpu.memory_space<vmem>>, vector<16x128xf32>
    %c0_1 = arith.constant 0 : index
    %c0_2 = arith.constant 0 : index
    %1 = vector.load %arg2[%c0_1, %c0_2] : memref<10x16xf32, #tpu.memory_space<vmem>>, vector<10x16xf32>
    %cst = arith.constant dense<0.000000e+00> : vector<10x128xf32>
    %2 = tpu.matmul %1, %0, %cst {dimension_numbers = #tpu.dot_dimension_numbers<[1], [0], [0], [1], [0, 0, 1, 1], [], []>} : vector<10x16xf32>, vector<16x128xf32>, vector<10x128xf32> -> vector<10x128xf32>
    %c0_3 = arith.constant 0 : index
    %c0_4 = arith.constant 0 : index
    %3 = vector.load %arg3[%c0_3, %c0_4] : memref<10x1xf32, #tpu.memory_space<vmem>>, vector<10x1xf32>
    %4 = vector.broadcast %3 : vector<10x1xf32> to vector<10x128xf32>
    %5 = arith.addf %2, %4 : vector<10x128xf32>
    %6 = arith.negf %5 : vector<10x128xf32>
    %7 = math.exp %6 : vector<10x128xf32>
    %cst_5 = arith.constant 1.000000e+00 : f32
    %8 = vector.broadcast %cst_5 : f32 to vector<10x128xf32>
    %9 = arith.addf %8, %7 : vector<10x128xf32>
    %10 = arith.divf %8, %9 : vector<10x128xf32>
    %11 = math.tanh %10 : vector<10x128xf32>
    %c0_6 = arith.constant 0 : index
    %c0_7 = arith.constant 0 : index
    %12 = vector.load %arg4[%c0_6, %c0_7] : memref<10x10xf32, #tpu.memory_space<vmem>>, vector<10x10xf32>
    %cst_8 = arith.constant dense<0.000000e+00> : vector<10x128xf32>
    %13 = tpu.matmul %12, %11, %cst_8 {dimension_numbers = #tpu.dot_dimension_numbers<[1], [0], [0], [1], [0, 0, 1, 1], [], []>} : vector<10x10xf32>, vector<10x128xf32>, vector<10x128xf32> -> vector<10x128xf32>
    %c0_9 = arith.constant 0 : index
    %c0_10 = arith.constant 0 : index
    %14 = vector.load %arg5[%c0_9, %c0_10] : memref<10x1xf32, #tpu.memory_space<vmem>>, vector<10x1xf32>
    %15 = vector.broadcast %14 : vector<10x1xf32> to vector<10x128xf32>
    %16 = arith.addf %13, %15 : vector<10x128xf32>
    %cst_11 = arith.constant 0.000000e+00 : f32
    %17 = vector.broadcast %cst_11 : f32 to vector<10x128xf32>
    %18 = arith.minimumf %16, %17 : vector<10x128xf32>
    %19 = math.absf %16 : vector<10x128xf32>
    %cst_12 = arith.constant 0.000000e+00 : f32
    %20 = vector.broadcast %cst_12 : f32 to vector<10x128xf32>
    %21 = arith.subf %20, %19 : vector<10x128xf32>
    %22 = math.exp %21 : vector<10x128xf32>
    %23 = math.log1p %22 : vector<10x128xf32>
    %24 = arith.subf %18, %23 : vector<10x128xf32>
    %c0_13 = arith.constant 0 : index
    %c0_14 = arith.constant 0 : index
    %25 = vector.load %arg6[%c0_13, %c0_14] : memref<4x10xf32, #tpu.memory_space<vmem>>, vector<4x10xf32>
    %cst_15 = arith.constant dense<0.000000e+00> : vector<4x128xf32>
    %26 = tpu.matmul %25, %24, %cst_15 {dimension_numbers = #tpu.dot_dimension_numbers<[1], [0], [0], [1], [0, 0, 1, 1], [], []>} : vector<4x10xf32>, vector<10x128xf32>, vector<4x128xf32> -> vector<4x128xf32>
    %c0_16 = arith.constant 0 : index
    %c0_17 = arith.constant 0 : index
    %27 = vector.load %arg7[%c0_16, %c0_17] : memref<4x1xf32, #tpu.memory_space<vmem>>, vector<4x1xf32>
    %28 = vector.broadcast %27 : vector<4x1xf32> to vector<4x128xf32>
    %29 = arith.addf %26, %28 : vector<4x128xf32>
    %c0_18 = arith.constant 0 : index
    %c0_19 = arith.constant 0 : index
    %30 = vector.load %arg8[%c0_18, %c0_19] : memref<4x128xf32, #tpu.memory_space<vmem>>, vector<4x128xf32>
    tpu.vector_store %arg8[%c0_18, %c0_19], %29 {strides = array<i32>} : memref<4x128xf32, #tpu.memory_space<vmem>>, vector<4x128xf32>,
    return
  }
  func.func @transform_0(%arg0: i32) -> (i32, i32) {
    %c0_i32 = arith.constant 0 : i32
    %c0_i32_0 = arith.constant 0 : i32
    return %c0_i32, %arg0 : i32, i32
  }
  func.func @transform_1(%arg0: i32) -> (i32, i32) {
    %c0_i32 = arith.constant 0 : i32
    %c0_i32_0 = arith.constant 0 : i32
    %c0_i32_1 = arith.constant 0 : i32
    return %c0_i32, %c0_i32_0 : i32, i32
  }
  func.func @transform_2(%arg0: i32) -> (i32, i32) {
    %c0_i32 = arith.constant 0 : i32
    %c0_i32_0 = arith.constant 0 : i32
    %c0_i32_1 = arith.constant 0 : i32
    return %c0_i32, %c0_i32_0 : i32, i32
  }
  func.func @transform_3(%arg0: i32) -> (i32, i32) {
    %c0_i32 = arith.constant 0 : i32
    %c0_i32_0 = arith.constant 0 : i32
    %c0_i32_1 = arith.constant 0 : i32
    return %c0_i32, %c0_i32_0 : i32, i32
  }
  func.func @transform_4(%arg0: i32) -> (i32, i32) {
    %c0_i32 = arith.constant 0 : i32
    %c0_i32_0 = arith.constant 0 : i32
    %c0_i32_1 = arith.constant 0 : i32
    return %c0_i32, %c0_i32_0 : i32, i32
  }
  func.func @transform_5(%arg0: i32) -> (i32, i32) {
    %c0_i32 = arith.constant 0 : i32
    %c0_i32_0 = arith.constant 0 : i32
    %c0_i32_1 = arith.constant 0 : i32
    return %c0_i32, %c0_i32_0 : i32, i32
  }
  func.func @transform_6(%arg0: i32) -> (i32, i32) {
    %c0_i32 = arith.constant 0 : i32
    %c0_i32_0 = arith.constant 0 : i32
    %c0_i32_1 = arith.constant 0 : i32
    return %c0_i32, %c0_i32_0 : i32, i32
  }
  func.func @transform_7(%arg0: i32) -> (i32, i32) {
    %c0_i32 = arith.constant 0 : i32
    %c0_i32_0 = arith.constant 0 : i32
    return %c0_i32, %arg0 : i32, i32
  }
}

</mosaic_0001>

<llo_original>
// kernel: narnn_forward.1
$region0: #{narnn_forward.1}
  #allocation0 [shape = 'u32[]', space=smem, size = 0x4, offset = 0x4, fixed_abs, tag = 'smem constant byte address 0x4 - core index']
  #allocation1 [shape = 'u32[144,128]{1,0:T(1,128)}', space=vmem, size = 0x12000, scoped, tag = 'internal scratch']
  %s0 = inlined_call_operand.vmem [shape: f32[16,128], index: 0, kind: input, shape index: {}]
  %s1 = inlined_call_operand.vmem [shape: f32[10,16], index: 1, kind: input, shape index: {}]
  %s2 = inlined_call_operand.vmem [shape: f32[10,1], index: 2, kind: input, shape index: {}]
  %s3 = inlined_call_operand.vmem [shape: f32[10,10], index: 3, kind: input, shape index: {}]
  %s4 = inlined_call_operand.vmem [shape: f32[10,1], index: 4, kind: input, shape index: {}]
  %s5 = inlined_call_operand.vmem [shape: f32[4,10], index: 5, kind: input, shape index: {}]
  %s6 = inlined_call_operand.vmem [shape: f32[4,1], index: 6, kind: input, shape index: {}]
  %s7 = inlined_call_operand.hbm [shape: f32[4,128], index: 7, kind: output, shape index: {}]
  %s8 = sld [smem:[#allocation0]]
  $region38: #{narnn_forward.1} parent=0
    _
  %s10 = ssub.s32 1, %s8
  %s11 = scalar_select 0, %s10, %s8
  $region1: #{narnn_forward.1} parent=0
    #allocation2 [shape = 'u8[2048]{0}', space=vmem, size = 0x800, scoped, tag = 'output window, operand 0, single buffered']
    #allocation3 [shape = 's32[1]{0}', space=sflag, size = 0x4, scoped, tag = 'scoped memory for narnn_forward.1']
    %12 = vsyncpa [#allocation3], 0
    // Predicated region
    $region2: #{narnn_forward.1} parent=1 // pred_check
      _
    $region3: #{narnn_forward.1} parent=1 // pred_check_branch
      %14 = sbr.rel (0) target = $region5
    $region4: #{narnn_forward.1} parent=1 // pred_region
      _
    $region5: #{narnn_forward.1} parent=1 // pred_fallthru
      _
    // Predicated region
    $region6: #{narnn_forward.1} parent=1 // pred_check
      _
    $region7: #{narnn_forward.1} parent=1 // pred_check_branch
      %16 = sbr.rel (0) target = $region9
    $region8: #{narnn_forward.1} parent=1 // pred_region
      _
    $region9: #{narnn_forward.1} parent=1 // pred_fallthru
      _
    // Predicated region
    $region10: #{narnn_forward.1} parent=1 // pred_check
      _
    $region11: #{narnn_forward.1} parent=1 // pred_check_branch
      %18 = sbr.rel (0) target = $region13
    $region12: #{narnn_forward.1} parent=1 // pred_region
      _
    $region13: #{narnn_forward.1} parent=1 // pred_fallthru
      _
    // Predicated region
    $region14: #{narnn_forward.1} parent=1 // pred_check
      _
    $region15: #{narnn_forward.1} parent=1 // pred_check_branch
      %20 = sbr.rel (0) target = $region17
    $region16: #{narnn_forward.1} parent=1 // pred_region
      _
    $region17: #{narnn_forward.1} parent=1 // pred_fallthru
      _
    // Predicated region
    $region18: #{narnn_forward.1} parent=1 // pred_check
      _
    $region19: #{narnn_forward.1} parent=1 // pred_check_branch
      %22 = sbr.rel (0) target = $region21
    $region20: #{narnn_forward.1} parent=1 // pred_region
      _
    $region21: #{narnn_forward.1} parent=1 // pred_fallthru
      _
    // Predicated region
    $region22: #{narnn_forward.1} parent=1 // pred_check
      _
    $region23: #{narnn_forward.1} parent=1 // pred_check_branch
      %24 = sbr.rel (0) target = $region25
    $region24: #{narnn_forward.1} parent=1 // pred_region
      _
    $region25: #{narnn_forward.1} parent=1 // pred_fallthru
      _
    // Predicated region
    $region26: #{narnn_forward.1} parent=1 // pred_check
      _
    $region27: #{narnn_forward.1} parent=1 // pred_check_branch
      %26 = sbr.rel (0) target = $region29
    $region28: #{narnn_forward.1} parent=1 // pred_region
      _
    $region29: #{narnn_forward.1} parent=1 // pred_fallthru
      _
    %v27 = vld [vmem:[%s0] sm:$0xff]
    %v28 = vld [vmem:[%s0 + $0x8] sm:$0xff]
    %v29 = vld [vmem:[%s1] sm:$0xff]
    %v30 = vld [vmem:[%s1 + $0x8] sm:$0x3]
    %v31 = vld [vmem:[%s2] sm:$0xff]
    %v32 = vld [vmem:[%s2 + $0x8] sm:$0x3]
    %34 = vset.pattern.permute.xlu0 0
    %35 = vperm.xlu0 %34, %v31
    %v36 = vpop.permute.xlu0 %35
    %39 = vset.pattern.permute.xlu0 0
    %40 = vperm.xlu0 %39, %v32
    %v41 = vpop.permute.xlu0 %40
    %vm43 = vcmask 130048
    %v45 = vsel %vm43, %v29, 0
    %v48 = vsel %vm43, %v30, 0
    %50 = vmatprep.subr.mxu0 0.0
    %51 = vmatpush1.msra.mxu0 0.0
    %52 = vmatprep.subr.mxu0 0.0
    %53 = vmatpush1.msra.mxu0 0.0
    %54 = vmatprep.subr.mxu0 0.0
    %55 = vmatpush1.msra.mxu0 0.0
    %56 = vmatprep.subr.mxu0 0.0
    %57 = vmatpush1.msra.mxu0 0.0
    %58 = vmatprep.subr.mxu0 0.0
    %59 = vmatpush1.msra.mxu0 0.0
    %60 = vmatprep.subr.mxu0 0.0
    %61 = vmatpush1.msra.mxu0 0.0
    %62 = vmatprep.subr.mxu0 0.0
    %63 = vmatpush1.msra.mxu0 0.0
    %64 = vmatprep.subr.mxu0 0.0
    %65 = vmatpush1.msra.mxu0 0.0
    %66 = vmatprep.subr.mxu0 0.0
    %67 = vmatpush1.msra.mxu0 0.0
    %68 = vmatprep.subr.mxu0 0.0
    %69 = vmatpush1.msra.mxu0 0.0
    %70 = vmatprep.subr.mxu0 0.0
    %71 = vmatpush1.msra.mxu0 0.0
    %72 = vmatprep.subr.mxu0 0.0
    %73 = vmatpush1.msra.mxu0 0.0
    %74 = vmatprep.subr.mxu0 0.0
    %75 = vmatpush1.msra.mxu0 0.0
    %76 = vmatprep.subr.mxu0 0.0
    %77 = vmatpush1.msra.mxu0 0.0
    %78 = vmatprep.subr.mxu0 0.0
    %79 = vmatpush1.msra.mxu0 %v28
    %80 = vmatprep.subr.mxu0 0.0
    %81 = vmatpush1.msra.mxu0 %v27
    %82 = vmatprep.subr.mxu0 0.0
    %83 = vmatpush2.msra.mxu0 0.0
    %84 = vmatprep.subr.mxu0 0.0
    %85 = vmatpush2.msra.mxu0 0.0
    %86 = vmatprep.subr.mxu0 0.0
    %87 = vmatpush2.msra.mxu0 0.0
    %88 = vmatprep.subr.mxu0 0.0
    %89 = vmatpush2.msra.mxu0 0.0
    %90 = vmatprep.subr.mxu0 0.0
    %91 = vmatpush2.msra.mxu0 0.0
    %92 = vmatprep.subr.mxu0 0.0
    %93 = vmatpush2.msra.mxu0 0.0
    %94 = vmatprep.subr.mxu0 0.0
    %95 = vmatpush2.msra.mxu0 0.0
    %96 = vmatprep.subr.mxu0 0.0
    %97 = vmatpush2.msra.mxu0 0.0
    %98 = vmatprep.subr.mxu0 0.0
    %99 = vmatpush2.msra.mxu0 0.0
    %100 = vmatprep.subr.mxu0 0.0
    %101 = vmatpush2.msra.mxu0 0.0
    %102 = vmatprep.subr.mxu0 0.0
    %103 = vmatpush2.msra.mxu0 0.0
    %104 = vmatprep.subr.mxu0 0.0
    %105 = vmatpush2.msra.mxu0 0.0
    %106 = vmatprep.subr.mxu0 0.0
    %107 = vmatpush2.msra.mxu0 0.0
    %108 = vmatprep.subr.mxu0 0.0
    %109 = vmatpush2.msra.mxu0 0.0
    %110 = vmatprep.subr.mxu0 0.0
    %111 = vmatpush2.msra.mxu0 0.0
    %112 = vmatprep.subr.mxu0 0.0
    %113 = vmatpush2.msra.mxu0 0.0
    %114 = vmatprep.mubr.f32.mxu0 0.0
    %115 = vmatmul.mubr.f32.gmra.mxu0 %v45
    %v116 = vpop.f32.mrf.mxu0
    %v117 = vadd.f32 %v36, %v116
    %v118 = vpop.f32.mrf.mxu0
    %119 = vmatprep.mubr.f32.mxu0 0.0
    %120 = vmatmul.mubr.f32.gmra.mxu0 %v48
    %v121 = vpop.f32.mrf.mxu0
    %v122 = vadd.f32 %v41, %v121
    %v123 = vpop.f32.mrf.mxu0
    %124 = vdwg.mxu0
    %v125 = vxor.u32 %v117, 2147483648
    %v126 = vxor.u32 %v122, 2147483648
    %v127 = vmul.f32 %v125, 1.442695
    %v128 = vpow.pop %v127
    %v129 = vmul.f32 %v126, 1.442695
    %v130 = vpow.pop %v129
    %v131 = vadd.f32 %v128, 1.0
    %v132 = vadd.f32 %v130, 1.0
    %v133 = vrcp.pop %v131
    %v134 = vmul.f32 1.0, %v133
    %v135 = vrcp.pop %v132
    %v136 = vmul.f32 1.0, %v135
    %v137 = vtanh.pop %v134
    %v138 = vtanh.pop %v136
    %v139 = vld [vmem:[%s3] sm:$0xff]
    %v140 = vld [vmem:[%s3 + $0x8] sm:$0x3]
    %v141 = vld [vmem:[%s4] sm:$0xff]
    %v142 = vld [vmem:[%s4 + $0x8] sm:$0x3]
    %144 = vset.pattern.permute.xlu0 0
    %145 = vperm.xlu0 %144, %v141
    %v146 = vpop.permute.xlu0 %145
    %149 = vset.pattern.permute.xlu0 0
    %150 = vperm.xlu0 %149, %v142
    %v151 = vpop.permute.xlu0 %150
    %vm153 = vcmask 80896
    %v155 = vsel %vm153, %v139, 0
    %v158 = vsel %vm153, %v140, 0
    %vm160 = vcmask 1041408
    %v162 = vsel %vm160, %v138, 0
    %164 = vmatprep.subr.mxu0 0.0
    %165 = vmatpush1.msra.mxu0 0.0
    %166 = vmatprep.subr.mxu0 0.0
    %167 = vmatpush1.msra.mxu0 0.0
    %168 = vmatprep.subr.mxu0 0.0
    %169 = vmatpush1.msra.mxu0 0.0
    %170 = vmatprep.subr.mxu0 0.0
    %171 = vmatpush1.msra.mxu0 0.0
    %172 = vmatprep.subr.mxu0 0.0
    %173 = vmatpush1.msra.mxu0 0.0
    %174 = vmatprep.subr.mxu0 0.0
    %175 = vmatpush1.msra.mxu0 0.0
    %176 = vmatprep.subr.mxu0 0.0
    %177 = vmatpush1.msra.mxu0 0.0
    %178 = vmatprep.subr.mxu0 0.0
    %179 = vmatpush1.msra.mxu0 0.0
    %180 = vmatprep.subr.mxu0 0.0
    %181 = vmatpush1.msra.mxu0 0.0
    %182 = vmatprep.subr.mxu0 0.0
    %183 = vmatpush1.msra.mxu0 0.0
    %184 = vmatprep.subr.mxu0 0.0
    %185 = vmatpush1.msra.mxu0 0.0
    %186 = vmatprep.subr.mxu0 0.0
    %187 = vmatpush1.msra.mxu0 0.0
    %188 = vmatprep.subr.mxu0 0.0
    %189 = vmatpush1.msra.mxu0 0.0
    %190 = vmatprep.subr.mxu0 0.0
    %191 = vmatpush1.msra.mxu0 0.0
    %192 = vmatprep.subr.mxu0 0.0
    %193 = vmatpush1.msra.mxu0 %v162
    %194 = vmatprep.subr.mxu0 0.0
    %195 = vmatpush1.msra.mxu0 %v137
    %196 = vmatprep.subr.mxu0 0.0
    %197 = vmatpush2.msra.mxu0 0.0
    %198 = vmatprep.subr.mxu0 0.0
    %199 = vmatpush2.msra.mxu0 0.0
    %200 = vmatprep.subr.mxu0 0.0
    %201 = vmatpush2.msra.mxu0 0.0
    %202 = vmatprep.subr.mxu0 0.0
    %203 = vmatpush2.msra.mxu0 0.0
    %204 = vmatprep.subr.mxu0 0.0
    %205 = vmatpush2.msra.mxu0 0.0
    %206 = vmatprep.subr.mxu0 0.0
    %207 = vmatpush2.msra.mxu0 0.0
    %208 = vmatprep.subr.mxu0 0.0
    %209 = vmatpush2.msra.mxu0 0.0
    %210 = vmatprep.subr.mxu0 0.0
    %211 = vmatpush2.msra.mxu0 0.0
    %212 = vmatprep.subr.mxu0 0.0
    %213 = vmatpush2.msra.mxu0 0.0
    %214 = vmatprep.subr.mxu0 0.0
    %215 = vmatpush2.msra.mxu0 0.0
    %216 = vmatprep.subr.mxu0 0.0
    %217 = vmatpush2.msra.mxu0 0.0
    %218 = vmatprep.subr.mxu0 0.0
    %219 = vmatpush2.msra.mxu0 0.0
    %220 = vmatprep.subr.mxu0 0.0
    %221 = vmatpush2.msra.mxu0 0.0
    %222 = vmatprep.subr.mxu0 0.0
    %223 = vmatpush2.msra.mxu0 0.0
    %224 = vmatprep.subr.mxu0 0.0
    %225 = vmatpush2.msra.mxu0 0.0
    %226 = vmatprep.subr.mxu0 0.0
    %227 = vmatpush2.msra.mxu0 0.0
    %228 = vmatprep.mubr.f32.mxu0 0.0
    %229 = vmatmul.mubr.f32.gmra.mxu0 %v155
    %v230 = vpop.f32.mrf.mxu0
    %v231 = vadd.f32 %v146, %v230
    %v232 = vpop.f32.mrf.mxu0
    %233 = vmatprep.mubr.f32.mxu0 0.0
    %234 = vmatmul.mubr.f32.gmra.mxu0 %v158
    %v235 = vpop.f32.mrf.mxu0
    %v236 = vadd.f32 %v151, %v235
    %v237 = vpop.f32.mrf.mxu0
    %238 = vdwg.mxu0
    %v239 = vmin.f32 %v231, 0.0
    %v240 = vmin.f32 %v236, 0.0
    %v241 = vand.u32 2147483647, %v231
    %v242 = vand.u32 2147483647, %v236
    %v243 = vsub.f32 0.0, %v241
    %v244 = vsub.f32 0.0, %v242
    %v245 = vmul.f32 %v243, 1.442695
    %v246 = vpow.pop %v245
    %v247 = vmul.f32 %v244, 1.442695
    %v248 = vpow.pop %v247
    %v249 = vadd.f32 %v246, 1.0
    %v250 = vlog2.pop %v249
    %v251 = vmul.f32 %v250, 0.6931472
    %v252 = vmul.f32 -0.5, %v246
    %v253 = vadd.f32 %v252, 1.0
    %v254 = vmul.f32 %v253, %v246
    %v255 = vand.u32 2147483647, %v246
    %vm256 = vcmp.lt.f32.partialorder %v255, 0.0004427343
    %v257 = vsel %vm256, %v254, %v251
    %v258 = vadd.f32 %v248, 1.0
    %v259 = vlog2.pop %v258
    %v260 = vmul.f32 %v259, 0.6931472
    %v261 = vmul.f32 -0.5, %v248
    %v262 = vadd.f32 %v261, 1.0
    %v263 = vmul.f32 %v262, %v248
    %v264 = vand.u32 2147483647, %v248
    %vm265 = vcmp.lt.f32.partialorder %v264, 0.0004427343
    %v266 = vsel %vm265, %v263, %v260
    %v267 = vsub.f32 %v239, %v257
    %v268 = vsub.f32 %v240, %v266
    %v269 = vld [vmem:[%s5] sm:$0xf]
    %v270 = vld [vmem:[%s6] sm:$0xf]
    %272 = vset.pattern.permute.xlu0 0
    %273 = vperm.xlu0 %272, %v270
    %v274 = vpop.permute.xlu0 %273
    %v277 = vsel %vm153, %v269, 0
    %v280 = vsel %vm160, %v268, 0
    %282 = vmatprep.subr.mxu0 0.0
    %283 = vmatpush1.msra.mxu0 0.0
    %284 = vmatprep.subr.mxu0 0.0
    %285 = vmatpush1.msra.mxu0 0.0
    %286 = vmatprep.subr.mxu0 0.0
    %287 = vmatpush1.msra.mxu0 0.0
    %288 = vmatprep.subr.mxu0 0.0
    %289 = vmatpush1.msra.mxu0 0.0
    %290 = vmatprep.subr.mxu0 0.0
    %291 = vmatpush1.msra.mxu0 0.0
    %292 = vmatprep.subr.mxu0 0.0
    %293 = vmatpush1.msra.mxu0 0.0
    %294 = vmatprep.subr.mxu0 0.0
    %295 = vmatpush1.msra.mxu0 0.0
    %296 = vmatprep.subr.mxu0 0.0
    %297 = vmatpush1.msra.mxu0 0.0
    %298 = vmatprep.subr.mxu0 0.0
    %299 = vmatpush1.msra.mxu0 0.0
    %300 = vmatprep.subr.mxu0 0.0
    %301 = vmatpush1.msra.mxu0 0.0
    %302 = vmatprep.subr.mxu0 0.0
    %303 = vmatpush1.msra.mxu0 0.0
    %304 = vmatprep.subr.mxu0 0.0
    %305 = vmatpush1.msra.mxu0 0.0
    %306 = vmatprep.subr.mxu0 0.0
    %307 = vmatpush1.msra.mxu0 0.0
    %308 = vmatprep.subr.mxu0 0.0
    %309 = vmatpush1.msra.mxu0 0.0
    %310 = vmatprep.subr.mxu0 0.0
    %311 = vmatpush1.msra.mxu0 %v280
    %312 = vmatprep.subr.mxu0 0.0
    %313 = vmatpush1.msra.mxu0 %v267
    %314 = vmatprep.subr.mxu0 0.0
    %315 = vmatpush2.msra.mxu0 0.0
    %316 = vmatprep.subr.mxu0 0.0
    %317 = vmatpush2.msra.mxu0 0.0
    %318 = vmatprep.subr.mxu0 0.0
    %319 = vmatpush2.msra.mxu0 0.0
    %320 = vmatprep.subr.mxu0 0.0
    %321 = vmatpush2.msra.mxu0 0.0
    %322 = vmatprep.subr.mxu0 0.0
    %323 = vmatpush2.msra.mxu0 0.0
    %324 = vmatprep.subr.mxu0 0.0
    %325 = vmatpush2.msra.mxu0 0.0
    %326 = vmatprep.subr.mxu0 0.0
    %327 = vmatpush2.msra.mxu0 0.0
    %328 = vmatprep.subr.mxu0 0.0
    %329 = vmatpush2.msra.mxu0 0.0
    %330 = vmatprep.subr.mxu0 0.0
    %331 = vmatpush2.msra.mxu0 0.0
    %332 = vmatprep.subr.mxu0 0.0
    %333 = vmatpush2.msra.mxu0 0.0
    %334 = vmatprep.subr.mxu0 0.0
    %335 = vmatpush2.msra.mxu0 0.0
    %336 = vmatprep.subr.mxu0 0.0
    %337 = vmatpush2.msra.mxu0 0.0
    %338 = vmatprep.subr.mxu0 0.0
    %339 = vmatpush2.msra.mxu0 0.0
    %340 = vmatprep.subr.mxu0 0.0
    %341 = vmatpush2.msra.mxu0 0.0
    %342 = vmatprep.subr.mxu0 0.0
    %343 = vmatpush2.msra.mxu0 0.0
    %344 = vmatprep.subr.mxu0 0.0
    %345 = vmatpush2.msra.mxu0 0.0
    %346 = vmatprep.mubr.f32.mxu0 0.0
    %347 = vmatmul.mubr.f32.gmra.mxu0 %v277
    %v348 = vpop.f32.mrf.mxu0
    %v349 = vadd.f32 %v274, %v348
    %v350 = vpop.f32.mrf.mxu0
    %351 = vdwg.mxu0
    %352 = vst [vmem:[#allocation2] sm:$0xf] %v349
    // Predicated region
    $region30: #{narnn_forward.1} parent=1 // pred_check
      _
    $region31: #{narnn_forward.1} parent=1 // pred_check_branch
      %354 = sbr.rel (0) target = $region33
    $region32: #{narnn_forward.1} parent=1 // pred_region
      %s356 = ssub.s32 64, 64
      %357 = vsyncadd [#allocation3], %s356
      %s359 = sshll.u32 [#allocation2], 4
      %s360 = int_to_ptr.vmem [resolvable:$true] %s359
      %362 = dma.vmem_to_hbm [thread:$0]  %s360, 64, %s7, [#allocation3]
    $region33: #{narnn_forward.1} parent=1 // pred_fallthru
      _
    // Predicated region
    $region34: #{narnn_forward.1} parent=1 // pred_check
      _
    $region35: #{narnn_forward.1} parent=1 // pred_check_branch
      %364 = sbr.rel (0) target = $region37
    $region36: #{narnn_forward.1} parent=1 // pred_region
      %365 = dma.done [#allocation3], 64
    $region37: #{narnn_forward.1} parent=1 // pred_fallthru
      _
    %366 = vsyncpa [#allocation3], 1

</llo_original>
